<compile_context>
chip_gen: v6e
topology: v6e:2x2x1
jax: 0.10.0
libtpu: 0.0.40
codegen_flags: <defaults>
</compile_context>

<pallas_src>
import functools

import jax
import jax.numpy as jnp
from jax.experimental import pallas as pl
from jax.experimental.pallas import tpu as pltpu


def _round_up(a, b):
    return (a + b - 1) // b * b


def _vmem_capacity_bytes():
    # Hardware capability query only (not a compile fallback).  Default to the
    # smallest current generation (v7x: 64 MiB / TensorCore) if unavailable.
    try:
        return int(pltpu.get_tpu_info().vmem_capacity_bytes)
    except Exception:
        return 64 * 1024 * 1024


def ffn_kernel(x_ref, w1_ref, b1_ref, w2_ref, b2_ref, o_ref, xn_ref, acc_ref,
               *, eps, d_in, approx_gelu):
    """Grid = (token row-tiles, d_hid K-tiles).  Output / scratch resident across K."""
    k = pl.program_id(1)
    nk = pl.num_programs(1)

    # ---- K == 0: LayerNorm (affine already folded into W1/b1) + init acc ----
    @pl.when(k == 0)
    def _():
        x = x_ref[...].astype(jnp.float32)               # (tm, d_in_p)
        d_in_p = x.shape[-1]
        inv_d = 1.0 / d_in
        mean = jnp.sum(x, axis=-1, keepdims=True) * inv_d  # pad lanes are zero
        xc = x - mean
        if d_in != d_in_p:                                # static (trace-time) branch
            lane = jax.lax.broadcasted_iota(jnp.int32, x.shape, dimension=1)
            xc = jnp.where(lane < d_in, xc, 0.0)
        var = jnp.sum(xc * xc, axis=-1, keepdims=True) * inv_d
        xn_ref[...] = (xc * jax.lax.rsqrt(var + eps)).astype(xn_ref.dtype)
        acc_ref[...] = jnp.zeros_like(acc_ref)

    # ---- Linear1 K-tile (bf16 MXU, f32 acc) + GELU ----
    h = jnp.dot(xn_ref[...], w1_ref[...], preferred_element_type=jnp.float32)
    h = h + b1_ref[...].astype(jnp.float32)               # (tm, tk)
    if approx_gelu:
        # tanh-GELU: transcendental goes to the EUP slot, hides under MXU work.
        c = 0.7978845608028654  # sqrt(2/pi)
        h = 0.5 * h * (1.0 + jnp.tanh(c * (h + 0.044715 * h * h * h)))
    else:
        # exact erf GELU (matches nn.GELU() default)
        h = 0.5 * h * (1.0 + jax.lax.erf(h * 0.7071067811865476))

    # ---- Linear2 K-tile: accumulate into the resident f32 output accumulator ----
    acc_ref[...] += jnp.dot(h.astype(jnp.bfloat16), w2_ref[...],
                            preferred_element_type=jnp.float32)

    # ---- K == last: bias + residual (re-read x, not held live) + store ----
    @pl.when(k == nk - 1)
    def _():
        out = acc_ref[...] + b2_ref[...].astype(jnp.float32)
        out = out + x_ref[...].astype(jnp.float32)
        o_ref[...] = out.astype(o_ref.dtype)


def _pad2(a, rows, cols, dtype):
    a = a.astype(dtype)
    if a.shape == (rows, cols):
        return a
    return jnp.zeros((rows, cols), dtype).at[:a.shape[0], :a.shape[1]].set(a)


def prepare_ffn_params(gamma, beta, w1, b1, w2, b2, *, tk=512):
    """One-time (call-invariant) weight prep: fold LN affine into Linear1 and pad.

    (xn * gamma + beta) @ W1 + b1  ==  xn @ (gamma[:, None] * W1) + (b1 + beta @ W1)
    The residual uses the raw x, so the fusion is exact (up to bf16 rounding).
    """
    f32, bf16 = jnp.float32, jnp.bfloat16
    d_in, d_hid = w1.shape

    d_in_p = _round_up(d_in, 128)
    tk = min(_round_up(tk, 128), _round_up(d_hid, 128))
    d_hid_p = _round_up(d_hid, tk)              # tk divides d_hid_p exactly

    w1f = gamma.astype(f32)[:, None] * w1.astype(f32)
    b1f = b1.astype(f32) + beta.astype(f32) @ w1.astype(f32)

    return dict(
        w1=_pad2(w1f, d_in_p, d_hid_p, bf16),
        b1=_pad2(b1f[None, :], 1, d_hid_p, f32),
        w2=_pad2(w2, d_hid_p, d_in_p, bf16),
        b2=_pad2(b2[None, :], 1, d_in_p, f32),
        d_in=d_in, d_hid=d_hid, d_in_p=d_in_p, d_hid_p=d_hid_p, tk=tk,
    )


def positionwise_ffn(x, params, *, eps=1e-5, tm=None, approx_gelu=True):
    """x: (B, S, d_in).  `params` from prepare_ffn_params.  Returns (B, S, d_in)."""
    B, S, d_in = x.shape
    assert d_in == params["d_in"]
    d_in_p, d_hid_p, tk = params["d_in_p"], params["d_hid_p"], params["tk"]
    N = B * S

    vmem_cap = _vmem_capacity_bytes()
    if tm is None:
        # v5e/v6e (128 MiB VMEM): bigger row tiles amortize per-step overhead and
        # halve weight HBM traffic.  v7x (64 MiB/TC): keep 256.
        tm = 512 if vmem_cap >= 96 * 1024 * 1024 else 256
    # bf16 tiles want (16, 128) sublane tiling -> round the clamp to 16, not 8.
    tm = min(_round_up(tm, 16), _round_up(N, 16))
    N_p = _round_up(N, tm)

    # Relayout x only when actually required (aligned shapes pass straight through).
    x2 = x.reshape(N, d_in)
    if N_p != N or d_in_p != d_in:
        x2 = jnp.zeros((N_p, d_in_p), x.dtype).at[:N, :d_in].set(x2)

    kernel = functools.partial(ffn_kernel, eps=eps, d_in=d_in,
                               approx_gelu=approx_gelu)

    # VMEM budget (K-streamed): x/out tiles + double-buffered bf16 weight K-tiles
    # + xn/acc scratch + hidden intermediates.  Bounded independent of d_hid.
    xb = jnp.dtype(x.dtype).itemsize
    est = (2 * tm * d_in_p * xb             # x tile, double-buffered
           + 2 * tm * d_in_p * xb           # out tile (resident) + writeback
           + 2 * d_in_p * tk * 2            # W1 K-tile bf16, double-buffered
           + 2 * tk * d_in_p * 2            # W2 K-tile bf16, double-buffered
           + 2 * (tk + d_in_p) * 4 * 2      # b1 / b2 tiles
           + tm * d_in_p * (2 + 4)          # xn (bf16) + acc (f32) scratch
           + 3 * tm * tk * 4)               # hidden (tm, tk) intermediates
    vmem_limit = min(max(int(est * 1.5), 32 * 1024 * 1024),
                     vmem_cap - 8 * 1024 * 1024)

    grid = (N_p // tm, d_hid_p // tk)
    in_specs = [
        pl.BlockSpec((tm, d_in_p), lambda i, k: (i, 0)),      # x row-tile (resident over K)
        pl.BlockSpec((d_in_p, tk), lambda i, k: (0, k)),      # W1 column K-tile
        pl.BlockSpec((1, tk), lambda i, k: (0, k)),           # b1 K-tile
        pl.BlockSpec((tk, d_in_p), lambda i, k: (k, 0)),      # W2 row K-tile
        pl.BlockSpec((1, d_in_p), lambda i, k: (0, 0)),       # b2 (constant, tiny)
    ]

    out = pl.pallas_call(
        kernel,
        out_shape=jax.ShapeDtypeStruct((N_p, d_in_p), x.dtype),
        grid_spec=pltpu.PrefetchScalarGridSpec(
            num_scalar_prefetch=0,
            grid=grid,
            in_specs=in_specs,
            out_specs=pl.BlockSpec((tm, d_in_p), lambda i, k: (i, 0)),
            scratch_shapes=[
                pltpu.VMEM((tm, d_in_p), jnp.bfloat16),   # normed x (matmul LHS)
                pltpu.VMEM((tm, d_in_p), jnp.float32),    # output accumulator
            ]),
        compiler_params=pltpu.CompilerParams(
            dimension_semantics=("parallel", "arbitrary"),
            vmem_limit_bytes=vmem_limit),
    )(x2, params["w1"], params["b1"], params["w2"], params["b2"])

    if N_p != N or d_in_p != d_in:
        out = out[:N, :d_in]
    return out.reshape(B, S, d_in)


def reference_ffn(x, gamma, beta, w1, b1, w2, b2, eps=1e-5):
    xf = x.astype(jnp.float32)
    mean = jnp.mean(xf, axis=-1, keepdims=True)
    var = jnp.mean((xf - mean) ** 2, axis=-1, keepdims=True)
    xn = (xf - mean) * jax.lax.rsqrt(var + eps) * gamma + beta
    h = xn @ w1 + b1
    h = 0.5 * h * (1.0 + jax.lax.erf(h / jnp.sqrt(2.0)))   # exact GELU (PyTorch default)
    out = h @ w2 + b2
    return (out + xf).astype(x.dtype)


if __name__ == "__main__":
    B, S, d_in, d_hid = 2, 8, 32, 128

    key = jax.random.PRNGKey(0)
    kx, kw1, kb1, kw2, kb2 = jax.random.split(key, 5)

    x = jax.random.normal(kx, (B, S, d_in), dtype=jnp.float32)

    # Parameters (shapes mirror nn.Linear / nn.LayerNorm; weights stored (in, out)).
    gamma = jnp.ones((d_in,), jnp.float32)
    beta = jnp.zeros((d_in,), jnp.float32)
    w1 = jax.random.normal(kw1, (d_in, d_hid), jnp.float32) * 0.05
    b1 = jax.random.normal(kb1, (d_hid,), jnp.float32) * 0.05
    w2 = jax.random.normal(kw2, (d_hid, d_in), jnp.float32) * 0.05
    b2 = jax.random.normal(kb2, (d_in,), jnp.float32) * 0.05

    # One-time weight prep (padding + LN-affine fold) outside the per-call path.
    params = prepare_ffn_params(gamma, beta, w1, b1, w2, b2)

    out = positionwise_ffn(x, params)
    out = jax.block_until_ready(out)

    ref = reference_ffn(x, gamma, beta, w1, b1, w2, b2)
    assert out.shape == (B, S, d_in)
    # bf16 MXU operands (f32 accumulate) + tanh-GELU -> bf16-level tolerance.
    assert jnp.allclose(out, ref, atol=2e-2, rtol=2e-2), float(
        jnp.max(jnp.abs(out - ref)))

    print("KERNEL_OK")
</pallas_src>

<mosaic_0001>
module attributes {stable_mosaic.version = 11 : i64} {
  func.func @ffn_kernel(%arg0: i32, %arg1: i32, %arg2: memref<16x128xf32, #tpu.memory_space<vmem>>, %arg3: memref<128x128xbf16, #tpu.memory_space<vmem>>, %arg4: memref<1x128xf32, #tpu.memory_space<vmem>>, %arg5: memref<128x128xbf16, #tpu.memory_space<vmem>>, %arg6: memref<1x128xf32, #tpu.memory_space<vmem>>, %arg7: memref<16x128xf32, #tpu.memory_space<vmem>>, %arg8: memref<16x128xbf16, #tpu.memory_space<vmem>>, %arg9: memref<16x128xf32, #tpu.memory_space<vmem>>) attributes {dimension_semantics = [#tpu.dimension_semantics<parallel>, #tpu.dimension_semantics<arbitrary>], iteration_bounds = array<i64: 1, 1>, scalar_prefetch = 0 : i64, scratch_operands = 2 : i64, tpu.core_type = #tpu.core_type<tc>, window_params = [{transform_indices = @transform_0, window_bounds = array<i64: 16, 128>}, {transform_indices = @transform_1, window_bounds = array<i64: 128, 128>}, {transform_indices = @transform_2, window_bounds = array<i64: 1, 128>}, {transform_indices = @transform_3, window_bounds = array<i64: 128, 128>}, {pipeline_mode = #tpu.pipeline_mode<synchronous>, transform_indices = @transform_4, window_bounds = array<i64: 1, 128>}, {transform_indices = @transform_5, window_bounds = array<i64: 16, 128>}]} {
    %c0_i32 = arith.constant 0 : i32
    %0 = arith.cmpi eq, %arg1, %c0_i32 : i32
    %1 = arith.extui %0 : i1 to i32
    %c0_i32_0 = arith.constant 0 : i32
    %2 = arith.cmpi ne, %1, %c0_i32_0 : i32
    scf.if %2 {
      %c0_19 = arith.constant 0 : index
      %c0_20 = arith.constant 0 : index
      %31 = vector.load %arg2[%c0_19, %c0_20] : memref<16x128xf32, #tpu.memory_space<vmem>>, vector<16x128xf32>
      %cst_21 = arith.constant dense<0.000000e+00> : vector<16xf32>
      %32 = vector.multi_reduction <add>, %31, %cst_21 [1] : vector<16x128xf32> to vector<16xf32>
      %33 = vector.shape_cast %32 : vector<16xf32> to vector<16x1xf32>
      %cst_22 = arith.constant 3.125000e-02 : f32
      %34 = vector.broadcast %cst_22 : f32 to vector<16x1xf32>
      %35 = arith.mulf %33, %34 : vector<16x1xf32>
      %36 = vector.broadcast %35 : vector<16x1xf32> to vector<16x128xf32>
      %37 = arith.subf %31, %36 : vector<16x128xf32>
      %38 = tpu.iota {dimensions = array<i32: 1>} : vector<16x128xi32>
      %c32_i32 = arith.constant 32 : i32
      %39 = vector.broadcast %c32_i32 : i32 to vector<16x128xi32>
      %40 = arith.cmpi slt, %38, %39 : vector<16x128xi32>
      %cst_23 = arith.constant 0.000000e+00 : f32
      %41 = vector.broadcast %cst_23 : f32 to vector<16x128xf32>
      %42 = arith.select %40, %37, %41 : vector<16x128xi1>, vector<16x128xf32>
      %43 = arith.mulf %42, %42 : vector<16x128xf32>
      %cst_24 = arith.constant dense<0.000000e+00> : vector<16xf32>
      %44 = vector.multi_reduction <add>, %43, %cst_24 [1] : vector<16x128xf32> to vector<16xf32>
      %45 = vector.shape_cast %44 : vector<16xf32> to vector<16x1xf32>
      %cst_25 = arith.constant 3.125000e-02 : f32
      %46 = vector.broadcast %cst_25 : f32 to vector<16x1xf32>
      %47 = arith.mulf %45, %46 : vector<16x1xf32>
      %cst_26 = arith.constant 9.99999974E-6 : f32
      %48 = vector.broadcast %cst_26 : f32 to vector<16x1xf32>
      %49 = arith.addf %47, %48 : vector<16x1xf32>
      %50 = math.rsqrt %49 : vector<16x1xf32>
      %51 = vector.broadcast %50 : vector<16x1xf32> to vector<16x128xf32>
      %52 = arith.mulf %42, %51 : vector<16x128xf32>
      %53 = arith.truncf %52 : vector<16x128xf32> to vector<16x128xbf16>
      %c0_27 = arith.constant 0 : index
      %c0_28 = arith.constant 0 : index
      %54 = vector.load %arg8[%c0_27, %c0_28] : memref<16x128xbf16, #tpu.memory_space<vmem>>, vector<16x128xbf16>
      tpu.vector_store %arg8[%c0_27, %c0_28], %53 {strides = array<i32>} : memref<16x128xbf16, #tpu.memory_space<vmem>>, vector<16x128xbf16>,
      %cst_29 = arith.constant 0.000000e+00 : f32
      %55 = vector.broadcast %cst_29 : f32 to vector<16x128xf32>
      %c0_30 = arith.constant 0 : index
      %c0_31 = arith.constant 0 : index
      %56 = vector.load %arg9[%c0_30, %c0_31] : memref<16x128xf32, #tpu.memory_space<vmem>>, vector<16x128xf32>
      tpu.vector_store %arg9[%c0_30, %c0_31], %55 {strides = array<i32>} : memref<16x128xf32, #tpu.memory_space<vmem>>, vector<16x128xf32>,
    } else {
    }
    %c0 = arith.constant 0 : index
    %c0_1 = arith.constant 0 : index
    %3 = vector.load %arg8[%c0, %c0_1] : memref<16x128xbf16, #tpu.memory_space<vmem>>, vector<16x128xbf16>
    %c0_2 = arith.constant 0 : index
    %c0_3 = arith.constant 0 : index
    %4 = vector.load %arg3[%c0_2, %c0_3] : memref<128x128xbf16, #tpu.memory_space<vmem>>, vector<128x128xbf16>
    %cst = arith.constant dense<0.000000e+00> : vector<16x128xf32>
    %5 = tpu.matmul %3, %4, %cst {dimension_numbers = #tpu.dot_dimension_numbers<[1], [0], [0], [1], [0, 0, 1, 1], [], []>} : vector<16x128xbf16>, vector<128x128xbf16>, vector<16x128xf32> -> vector<16x128xf32>
    %c0_4 = arith.constant 0 : index
    %c0_5 = arith.constant 0 : index
    %6 = vector.load %arg4[%c0_4, %c0_5] : memref<1x128xf32, #tpu.memory_space<vmem>>, vector<1x128xf32>
    %7 = vector.broadcast %6 : vector<1x128xf32> to vector<16x128xf32>
    %8 = arith.addf %5, %7 : vector<16x128xf32>
    %cst_6 = arith.constant 5.000000e-01 : f32
    %9 = vector.broadcast %cst_6 : f32 to vector<16x128xf32>
    %10 = arith.mulf %9, %8 : vector<16x128xf32>
    %cst_7 = arith.constant 4.471500e-02 : f32
    %11 = vector.broadcast %cst_7 : f32 to vector<16x128xf32>
    %12 = arith.mulf %11, %8 : vector<16x128xf32>
    %13 = arith.mulf %12, %8 : vector<16x128xf32>
    %14 = arith.mulf %13, %8 : vector<16x128xf32>
    %15 = arith.addf %8, %14 : vector<16x128xf32>
    %cst_8 = arith.constant 0.797884583 : f32
    %16 = vector.broadcast %cst_8 : f32 to vector<16x128xf32>
    %17 = arith.mulf %16, %15 : vector<16x128xf32>
    %18 = math.tanh %17 : vector<16x128xf32>
    %cst_9 = arith.constant 1.000000e+00 : f32
    %19 = vector.broadcast %cst_9 : f32 to vector<16x128xf32>
    %20 = arith.addf %19, %18 : vector<16x128xf32>
    %21 = arith.mulf %10, %20 : vector<16x128xf32>
    %c0_10 = arith.constant 0 : index
    %c0_11 = arith.constant 0 : index
    %22 = vector.load %arg9[%c0_10, %c0_11] : memref<16x128xf32, #tpu.memory_space<vmem>>, vector<16x128xf32>
    %23 = arith.truncf %21 : vector<16x128xf32> to vector<16x128xbf16>
    %c0_12 = arith.constant 0 : index
    %c0_13 = arith.constant 0 : index
    %24 = vector.load %arg5[%c0_12, %c0_13] : memref<128x128xbf16, #tpu.memory_space<vmem>>, vector<128x128xbf16>
    %cst_14 = arith.constant dense<0.000000e+00> : vector<16x128xf32>
    %25 = tpu.matmul %23, %24, %cst_14 {dimension_numbers = #tpu.dot_dimension_numbers<[1], [0], [0], [1], [0, 0, 1, 1], [], []>} : vector<16x128xbf16>, vector<128x128xbf16>, vector<16x128xf32> -> vector<16x128xf32>
    %26 = arith.addf %22, %25 : vector<16x128xf32>
    %c0_15 = arith.constant 0 : index
    %c0_16 = arith.constant 0 : index
    %27 = vector.load %arg9[%c0_15, %c0_16] : memref<16x128xf32, #tpu.memory_space<vmem>>, vector<16x128xf32>
    tpu.vector_store %arg9[%c0_15, %c0_16], %26 {strides = array<i32>} : memref<16x128xf32, #tpu.memory_space<vmem>>, vector<16x128xf32>,
    %c0_i32_17 = arith.constant 0 : i32
    %28 = arith.cmpi eq, %arg1, %c0_i32_17 : i32
    %29 = arith.extui %28 : i1 to i32
    %c0_i32_18 = arith.constant 0 : i32
    %30 = arith.cmpi ne, %29, %c0_i32_18 : i32
    scf.if %30 {
      %c0_19 = arith.constant 0 : index
      %c0_20 = arith.constant 0 : index
      %31 = vector.load %arg9[%c0_19, %c0_20] : memref<16x128xf32, #tpu.memory_space<vmem>>, vector<16x128xf32>
      %c0_21 = arith.constant 0 : index
      %c0_22 = arith.constant 0 : index
      %32 = vector.load %arg6[%c0_21, %c0_22] : memref<1x128xf32, #tpu.memory_space<vmem>>, vector<1x128xf32>
      %33 = vector.broadcast %32 : vector<1x128xf32> to vector<16x128xf32>
      %34 = arith.addf %31, %33 : vector<16x128xf32>
      %c0_23 = arith.constant 0 : index
      %c0_24 = arith.constant 0 : index
      %35 = vector.load %arg2[%c0_23, %c0_24] : memref<16x128xf32, #tpu.memory_space<vmem>>, vector<16x128xf32>
      %36 = arith.addf %34, %35 : vector<16x128xf32>
      %c0_25 = arith.constant 0 : index
      %c0_26 = arith.constant 0 : index
      %37 = vector.load %arg7[%c0_25, %c0_26] : memref<16x128xf32, #tpu.memory_space<vmem>>, vector<16x128xf32>
      tpu.vector_store %arg7[%c0_25, %c0_26], %36 {strides = array<i32>} : memref<16x128xf32, #tpu.memory_space<vmem>>, vector<16x128xf32>,
    } else {
    }
    return
  }
  func.func @transform_0(%arg0: i32, %arg1: i32) -> (i32, i32) {
    %c0_i32 = arith.constant 0 : i32
    %c0_i32_0 = arith.constant 0 : i32
    return %arg0, %c0_i32 : i32, i32
  }
  func.func @transform_1(%arg0: i32, %arg1: i32) -> (i32, i32) {
    %c0_i32 = arith.constant 0 : i32
    %c0_i32_0 = arith.constant 0 : i32
    return %c0_i32, %arg1 : i32, i32
  }
  func.func @transform_2(%arg0: i32, %arg1: i32) -> (i32, i32) {
    %c0_i32 = arith.constant 0 : i32
    %c0_i32_0 = arith.constant 0 : i32
    return %c0_i32, %arg1 : i32, i32
  }
  func.func @transform_3(%arg0: i32, %arg1: i32) -> (i32, i32) {
    %c0_i32 = arith.constant 0 : i32
    %c0_i32_0 = arith.constant 0 : i32
    return %arg1, %c0_i32 : i32, i32
  }
  func.func @transform_4(%arg0: i32, %arg1: i32) -> (i32, i32) {
    %c0_i32 = arith.constant 0 : i32
    %c0_i32_0 = arith.constant 0 : i32
    %c0_i32_1 = arith.constant 0 : i32
    return %c0_i32, %c0_i32_0 : i32, i32
  }
  func.func @transform_5(%arg0: i32, %arg1: i32) -> (i32, i32) {
    %c0_i32 = arith.constant 0 : i32
    %c0_i32_0 = arith.constant 0 : i32
    return %arg0, %c0_i32 : i32, i32
  }
}

</mosaic_0001>

<llo_original>
// kernel: tpu_custom_call.1
$region0: #{tpu_custom_call.1}
  #allocation0 [shape = 'u32[]', space=smem, size = 0x4, offset = 0x4, fixed_abs, tag = 'smem constant byte address 0x4 - core index']
  #allocation1 [shape = 'u32[144,128]{1,0:T(1,128)}', space=vmem, size = 0x12000, scoped, tag = 'internal scratch']
  #allocation2 [shape = 'bf16[16,128]{1,0:T(8,128)(2,1)}', space=vmem, size = 0x1000, scoped, tag = 'scratch operand']
  #allocation3 [shape = 'f32[16,128]{1,0:T(8,128)}', space=vmem, size = 0x2000, scoped, tag = 'scratch operand']
  %s0 = inlined_call_operand.hbm [shape: f32[16,128], index: 0, kind: input, shape index: {}]
  %s1 = inlined_call_operand.hbm [shape: bf16[128,128], index: 1, kind: input, shape index: {}]
  %s2 = inlined_call_operand.vmem [shape: f32[1,128], index: 2, kind: input, shape index: {}]
  %s3 = inlined_call_operand.hbm [shape: bf16[128,128], index: 3, kind: input, shape index: {}]
  %s4 = inlined_call_operand.vmem [shape: f32[1,128], index: 4, kind: input, shape index: {}]
  %s5 = inlined_call_operand.hbm [shape: f32[16,128], index: 5, kind: output, shape index: {}]
  %s6 = sld [smem:[#allocation0]]
  $region50: #{tpu_custom_call.1} parent=0
    _
  %s8 = ssub.s32 1, %s6
  %s9 = scalar_select 0, %s8, %s6
  $region1: #{tpu_custom_call.1} parent=0
    #allocation4 [shape = 'u8[8192]{0}', space=vmem, size = 0x2000, scoped, tag = 'input window, operand 0, single buffered']
    #allocation5 [shape = 's32[1]{0}', space=sflag, size = 0x4, scoped, tag = 'scoped memory for tpu_custom_call.1']
    #allocation6 [shape = 's32[1]{0}', space=sflag, size = 0x4, scoped, tag = 'scoped memory for tpu_custom_call.1']
    #allocation7 [shape = 'u8[32768]{0}', space=vmem, size = 0x8000, scoped, tag = 'input window, operand 1, single buffered']
    #allocation8 [shape = 's32[1]{0}', space=sflag, size = 0x4, scoped, tag = 'scoped memory for tpu_custom_call.1']
    #allocation9 [shape = 'u8[32768]{0}', space=vmem, size = 0x8000, scoped, tag = 'input window, operand 3, single buffered']
    #allocation10 [shape = 'u8[8192]{0}', space=vmem, size = 0x2000, scoped, tag = 'output window, operand 0, single buffered']
    %10 = vsyncpa [#allocation5], 0
    %11 = vsyncpa [#allocation8], 0
    %12 = vsyncpa [#allocation6], 0
    // Predicated region
    $region2: #{tpu_custom_call.1} parent=1 // pred_check
      _
    $region3: #{tpu_custom_call.1} parent=1 // pred_check_branch
      %14 = sbr.rel (0) target = $region5
    $region4: #{tpu_custom_call.1} parent=1 // pred_region
      %s16 = ssub.s32 256, 256
      %17 = vsyncadd [#allocation5], %s16
      %s18 = sshll.u32 [#allocation4], 4
      %s19 = int_to_ptr.vmem [resolvable:$true] %s18
      %24 = dma.hbm_to_vmem [thread:$0]  %s0, 256, %s19, [#allocation5], 128, 128, 8
    $region5: #{tpu_custom_call.1} parent=1 // pred_fallthru
      _
    // Predicated region
    $region6: #{tpu_custom_call.1} parent=1 // pred_check
      _
    $region7: #{tpu_custom_call.1} parent=1 // pred_check_branch
      %26 = sbr.rel (0) target = $region9
    $region8: #{tpu_custom_call.1} parent=1 // pred_region
      %s28 = ssub.s32 1024, 1024
      %29 = vsyncadd [#allocation8], %s28
      %s30 = sshll.u32 [#allocation7], 4
      %s31 = int_to_ptr.vmem [resolvable:$true] %s30
      %36 = dma.hbm_to_vmem [thread:$0]  %s1, 1024, %s31, [#allocation8], 64, 64, 4
    $region9: #{tpu_custom_call.1} parent=1 // pred_fallthru
      _
    // Predicated region
    $region10: #{tpu_custom_call.1} parent=1 // pred_check
      _
    $region11: #{tpu_custom_call.1} parent=1 // pred_check_branch
      %38 = sbr.rel (0) target = $region13
    $region12: #{tpu_custom_call.1} parent=1 // pred_region
      _
    $region13: #{tpu_custom_call.1} parent=1 // pred_fallthru
      _
    // Predicated region
    $region14: #{tpu_custom_call.1} parent=1 // pred_check
      _
    $region15: #{tpu_custom_call.1} parent=1 // pred_check_branch
      %40 = sbr.rel (0) target = $region17
    $region16: #{tpu_custom_call.1} parent=1 // pred_region
      %s42 = ssub.s32 1024, 1024
      %43 = vsyncadd [#allocation8], %s42
      %s44 = sshll.u32 [#allocation9], 4
      %s45 = int_to_ptr.vmem [resolvable:$true] %s44
      %50 = dma.hbm_to_vmem [thread:$0]  %s3, 1024, %s45, [#allocation8], 64, 64, 4
    $region17: #{tpu_custom_call.1} parent=1 // pred_fallthru
      _
    // Predicated region
    $region18: #{tpu_custom_call.1} parent=1 // pred_check
      _
    $region19: #{tpu_custom_call.1} parent=1 // pred_check_branch
      %52 = sbr.rel (0) target = $region21
    $region20: #{tpu_custom_call.1} parent=1 // pred_region
      _
    $region21: #{tpu_custom_call.1} parent=1 // pred_fallthru
      _
    // Predicated region
    $region22: #{tpu_custom_call.1} parent=1 // pred_check
      _
    $region23: #{tpu_custom_call.1} parent=1 // pred_check_branch
      %54 = sbr.rel (0) target = $region25
    $region24: #{tpu_custom_call.1} parent=1 // pred_region
      %55 = dma.done [#allocation5], 256
    $region25: #{tpu_custom_call.1} parent=1 // pred_fallthru
      _
    // Predicated region
    $region26: #{tpu_custom_call.1} parent=1 // pred_check
      _
    $region27: #{tpu_custom_call.1} parent=1 // pred_check_branch
      %57 = sbr.rel (0) target = $region29
    $region28: #{tpu_custom_call.1} parent=1 // pred_region
      %58 = dma.done [#allocation8], 1024
    $region29: #{tpu_custom_call.1} parent=1 // pred_fallthru
      _
    // Predicated region
    $region30: #{tpu_custom_call.1} parent=1 // pred_check
      _
    $region31: #{tpu_custom_call.1} parent=1 // pred_check_branch
      %60 = sbr.rel (0) target = $region33
    $region32: #{tpu_custom_call.1} parent=1 // pred_region
      %61 = dma.done [#allocation8], 1024
    $region33: #{tpu_custom_call.1} parent=1 // pred_fallthru
      _
    %p63 = scmp.eq.s32.totalorder 0, 0
    // Predicated region
    $region34: #{tpu_custom_call.1} parent=1 // pred_check
      %p64 = pneg %p63
    $region35: #{tpu_custom_call.1} parent=1 // pred_check_branch
      %66 = sbr.rel (%p64) target = $region37
    $region36: #{tpu_custom_call.1} parent=1 // pred_region
      %v67 = vld [vmem:[#allocation4] sm:$0xff]
      %v68 = vld [vmem:[#allocation4 + $0x8] sm:$0xff]
      %69 = vadd.xlane.f32.xlu0 %v67
      %v70 = vpop.xlane.xlu0 %69
      %71 = vadd.xlane.f32.xlu0 %v68
      %v72 = vpop.xlane.xlu0 %71
      %v73 = vmul.f32 %v70, 0.03125
      %v74 = vmul.f32 %v72, 0.03125
      %v75 = vsub.f32 %v67, %v73
      %v76 = vsub.f32 %v68, %v74
      %v77 = vlaneseq
      %v78 = vand.u32 %v77, 127
      %vm79 = vcmp.lt.s32.totalorder %v78, 32
      %v80 = vsel %vm79, %v75, 0.0
      %v81 = vsel %vm79, %v76, 0.0
      %v82 = vmul.f32 %v80, %v80
      %v83 = vmul.f32 %v81, %v81
      %84 = vadd.xlane.f32.xlu0 %v82
      %v85 = vpop.xlane.xlu0 %84
      %86 = vadd.xlane.f32.xlu0 %v83
      %v87 = vpop.xlane.xlu0 %86
      %v88 = vmul.f32 %v85, 0.03125
      %v89 = vmul.f32 %v87, 0.03125
      %v90 = vadd.f32 %v88, 1e-05
      %v91 = vadd.f32 %v89, 1e-05
      %v92 = vrsqrt.pop %v90
      %v93 = vrsqrt.pop %v91
      %v94 = vmul.f32 %v80, %v92
      %v95 = vmul.f32 %v81, %v93
      %v96 = vpack.c.bf16 %v95, %v94
      %v98 = vunpack.c.l.b16 %v96
      %v99 = vunpack.c.h.b16 %v96
      %v100 = vpack.c.b16 %v98, %v98
      %v101 = vpack.c.b16 %v99, %v99
      %104 = vst [vmem:[#allocation2] sm:$0xf] %v100
      %105 = vst [vmem:[#allocation2 + $0x4] sm:$0xf] %v101
      %106 = vst [vmem:[#allocation3] sm:$0xff] 0.0
      %107 = vst [vmem:[#allocation3 + $0x8] sm:$0xff] 0.0
    $region37: #{tpu_custom_call.1} parent=1 // pred_fallthru
      _
    %v108 = vld [vmem:[#allocation2] sm:$0xf]
    %v109 = vld [vmem:[#allocation2 + $0x4] sm:$0xf]
    %v110 = vld [vmem:[#allocation7] sm:$0xf]
    %v111 = vld [vmem:[#allocation7 + $0x4] sm:$0xf]
    %v112 = vld [vmem:[#allocation7 + $0x8] sm:$0xf]
    %v113 = vld [vmem:[#allocation7 + $0xc] sm:$0xf]
    %v114 = vld [vmem:[#allocation7 + $0x10] sm:$0xf]
    %v115 = vld [vmem:[#allocation7 + $0x14] sm:$0xf]
    %v116 = vld [vmem:[#allocation7 + $0x18] sm:$0xf]
    %v117 = vld [vmem:[#allocation7 + $0x1c] sm:$0xf]
    %v118 = vld [vmem:[#allocation7 + $0x20] sm:$0xf]
    %v119 = vld [vmem:[#allocation7 + $0x24] sm:$0xf]
    %v120 = vld [vmem:[#allocation7 + $0x28] sm:$0xf]
    %v121 = vld [vmem:[#allocation7 + $0x2c] sm:$0xf]
    %v122 = vld [vmem:[#allocation7 + $0x30] sm:$0xf]
    %v123 = vld [vmem:[#allocation7 + $0x34] sm:$0xf]
    %v124 = vld [vmem:[#allocation7 + $0x38] sm:$0xf]
    %v125 = vld [vmem:[#allocation7 + $0x3c] sm:$0xf]
    %v126 = vld [vmem:[%s2] sm:$0x1]
    %v128 = vlaneseq
    %v129 = vshrl.u32 %v128, 7
    %v130 = vsub.s32 0, %v129
    %v131 = vrot.slane %v126, %v130
    %v135 = vunpack.c.l.b16 %v108
    %v136 = vunpack.c.l.b16 %v109
    %v137 = vpack.c.b16 %v136, %v135
    %v155 = vunpack.c.l.b16 %v110
    %v156 = vunpack.c.l.b16 %v111
    %v157 = vunpack.c.l.b16 %v112
    %v158 = vunpack.c.l.b16 %v113
    %v159 = vunpack.c.l.b16 %v114
    %v160 = vunpack.c.l.b16 %v115
    %v161 = vunpack.c.l.b16 %v116
    %v162 = vunpack.c.l.b16 %v117
    %v163 = vunpack.c.l.b16 %v118
    %v164 = vunpack.c.l.b16 %v119
    %v165 = vunpack.c.l.b16 %v120
    %v166 = vunpack.c.l.b16 %v121
    %v167 = vunpack.c.l.b16 %v122
    %v168 = vunpack.c.l.b16 %v123
    %v169 = vunpack.c.l.b16 %v124
    %v170 = vunpack.c.l.b16 %v125
    %v171 = vpack.c.b16 %v156, %v155
    %v172 = vpack.c.b16 %v158, %v157
    %v173 = vpack.c.b16 %v160, %v159
    %v174 = vpack.c.b16 %v162, %v161
    %v175 = vpack.c.b16 %v164, %v163
    %v176 = vpack.c.b16 %v166, %v165
    %v177 = vpack.c.b16 %v168, %v167
    %v178 = vpack.c.b16 %v170, %v169
    %187 = vmatprep.subr.bf16.mxu0 0
    %188 = vmatpush1.bf16.msra.mxu0 %v178
    %189 = vmatprep.subr.bf16.mxu0 0
    %190 = vmatpush1.bf16.msra.mxu0 %v177
    %191 = vmatprep.subr.bf16.mxu0 0
    %192 = vmatpush1.bf16.msra.mxu0 %v176
    %193 = vmatprep.subr.bf16.mxu0 0
    %194 = vmatpush1.bf16.msra.mxu0 %v175
    %195 = vmatprep.subr.bf16.mxu0 0
    %196 = vmatpush1.bf16.msra.mxu0 %v174
    %197 = vmatprep.subr.bf16.mxu0 0
    %198 = vmatpush1.bf16.msra.mxu0 %v173
    %199 = vmatprep.subr.bf16.mxu0 0
    %200 = vmatpush1.bf16.msra.mxu0 %v172
    %201 = vmatprep.subr.bf16.mxu0 0
    %202 = vmatpush1.bf16.msra.mxu0 %v171
    %203 = vmatprep.subr.bf16.mxu0 0
    %204 = vmatpush2.bf16.msra.mxu0 0
    %205 = vmatprep.subr.bf16.mxu0 0
    %206 = vmatpush2.bf16.msra.mxu0 0
    %207 = vmatprep.subr.bf16.mxu0 0
    %208 = vmatpush2.bf16.msra.mxu0 0
    %209 = vmatprep.subr.bf16.mxu0 0
    %210 = vmatpush2.bf16.msra.mxu0 0
    %211 = vmatprep.subr.bf16.mxu0 0
    %212 = vmatpush2.bf16.msra.mxu0 0
    %213 = vmatprep.subr.bf16.mxu0 0
    %214 = vmatpush2.bf16.msra.mxu0 0
    %215 = vmatprep.subr.bf16.mxu0 0
    %216 = vmatpush2.bf16.msra.mxu0 0
    %217 = vmatprep.subr.bf16.mxu0 0
    %218 = vmatpush2.bf16.msra.mxu0 0
    %219 = vmatprep.mubr.bf16.mxu0 0
    %220 = vmatmul.mubr.bf16.gmra.mxu0 %v137
    %v221 = vpop.f32.mrf.mxu0
    %v222 = vadd.f32 %v131, %v221
    %v223 = vpop.f32.mrf.mxu0
    %v224 = vpop.f32.mrf.mxu0
    %v225 = vadd.f32 %v131, %v224
    %v226 = vpop.f32.mrf.mxu0
    %227 = vdwg.mxu0
    %v228 = vmul.f32 %v222, 0.5
    %v229 = vmul.f32 %v225, 0.5
    %v230 = vmul.f32 %v222, 0.044715
    %v231 = vmul.f32 %v225, 0.044715
    %v232 = vmul.f32 %v230, %v222
    %v233 = vmul.f32 %v231, %v225
    %v234 = vmul.f32 %v232, %v222
    %v235 = vmul.f32 %v233, %v225
    %v236 = vadd.f32 %v222, %v234
    %v237 = vadd.f32 %v225, %v235
    %v238 = vmul.f32 %v236, 0.7978846
    %v239 = vmul.f32 %v237, 0.7978846
    %v240 = vtanh.pop %v238
    %v241 = vtanh.pop %v239
    %v242 = vadd.f32 %v240, 1.0
    %v243 = vadd.f32 %v241, 1.0
    %v244 = vmul.f32 %v228, %v242
    %v245 = vmul.f32 %v229, %v243
    %v246 = vld [vmem:[#allocation3] sm:$0xff]
    %v247 = vld [vmem:[#allocation3 + $0x8] sm:$0xff]
    %v248 = vpack.c.bf16 %v245, %v244
    %v249 = vld [vmem:[#allocation9] sm:$0xf]
    %v250 = vld [vmem:[#allocation9 + $0x4] sm:$0xf]
    %v251 = vld [vmem:[#allocation9 + $0x8] sm:$0xf]
    %v252 = vld [vmem:[#allocation9 + $0xc] sm:$0xf]
    %v253 = vld [vmem:[#allocation9 + $0x10] sm:$0xf]
    %v254 = vld [vmem:[#allocation9 + $0x14] sm:$0xf]
    %v255 = vld [vmem:[#allocation9 + $0x18] sm:$0xf]
    %v256 = vld [vmem:[#allocation9 + $0x1c] sm:$0xf]
    %v257 = vld [vmem:[#allocation9 + $0x20] sm:$0xf]
    %v258 = vld [vmem:[#allocation9 + $0x24] sm:$0xf]
    %v259 = vld [vmem:[#allocation9 + $0x28] sm:$0xf]
    %v260 = vld [vmem:[#allocation9 + $0x2c] sm:$0xf]
    %v261 = vld [vmem:[#allocation9 + $0x30] sm:$0xf]
    %v262 = vld [vmem:[#allocation9 + $0x34] sm:$0xf]
    %v263 = vld [vmem:[#allocation9 + $0x38] sm:$0xf]
    %v264 = vld [vmem:[#allocation9 + $0x3c] sm:$0xf]
    %v281 = vunpack.c.l.b16 %v249
    %v282 = vunpack.c.l.b16 %v250
    %v283 = vunpack.c.l.b16 %v251
    %v284 = vunpack.c.l.b16 %v252
    %v285 = vunpack.c.l.b16 %v253
    %v286 = vunpack.c.l.b16 %v254
    %v287 = vunpack.c.l.b16 %v255
    %v288 = vunpack.c.l.b16 %v256
    %v289 = vunpack.c.l.b16 %v257
    %v290 = vunpack.c.l.b16 %v258
    %v291 = vunpack.c.l.b16 %v259
    %v292 = vunpack.c.l.b16 %v260
    %v293 = vunpack.c.l.b16 %v261
    %v294 = vunpack.c.l.b16 %v262
    %v295 = vunpack.c.l.b16 %v263
    %v296 = vunpack.c.l.b16 %v264
    %v297 = vpack.c.b16 %v282, %v281
    %v298 = vpack.c.b16 %v284, %v283
    %v299 = vpack.c.b16 %v286, %v285
    %v300 = vpack.c.b16 %v288, %v287
    %v301 = vpack.c.b16 %v290, %v289
    %v302 = vpack.c.b16 %v292, %v291
    %v303 = vpack.c.b16 %v294, %v293
    %v304 = vpack.c.b16 %v296, %v295
    %313 = vmatprep.subr.bf16.mxu0 0
    %314 = vmatpush1.bf16.msra.mxu0 %v304
    %315 = vmatprep.subr.bf16.mxu0 0
    %316 = vmatpush1.bf16.msra.mxu0 %v303
    %317 = vmatprep.subr.bf16.mxu0 0
    %318 = vmatpush1.bf16.msra.mxu0 %v302
    %319 = vmatprep.subr.bf16.mxu0 0
    %320 = vmatpush1.bf16.msra.mxu0 %v301
    %321 = vmatprep.subr.bf16.mxu0 0
    %322 = vmatpush1.bf16.msra.mxu0 %v300
    %323 = vmatprep.subr.bf16.mxu0 0
    %324 = vmatpush1.bf16.msra.mxu0 %v299
    %325 = vmatprep.subr.bf16.mxu0 0
    %326 = vmatpush1.bf16.msra.mxu0 %v298
    %327 = vmatprep.subr.bf16.mxu0 0
    %328 = vmatpush1.bf16.msra.mxu0 %v297
    %329 = vmatprep.subr.bf16.mxu0 0
    %330 = vmatpush2.bf16.msra.mxu0 0
    %331 = vmatprep.subr.bf16.mxu0 0
    %332 = vmatpush2.bf16.msra.mxu0 0
    %333 = vmatprep.subr.bf16.mxu0 0
    %334 = vmatpush2.bf16.msra.mxu0 0
    %335 = vmatprep.subr.bf16.mxu0 0
    %336 = vmatpush2.bf16.msra.mxu0 0
    %337 = vmatprep.subr.bf16.mxu0 0
    %338 = vmatpush2.bf16.msra.mxu0 0
    %339 = vmatprep.subr.bf16.mxu0 0
    %340 = vmatpush2.bf16.msra.mxu0 0
    %341 = vmatprep.subr.bf16.mxu0 0
    %342 = vmatpush2.bf16.msra.mxu0 0
    %343 = vmatprep.subr.bf16.mxu0 0
    %344 = vmatpush2.bf16.msra.mxu0 0
    %345 = vmatprep.mubr.bf16.mxu0 0
    %346 = vmatmul.mubr.bf16.gmra.mxu0 %v248
    %v347 = vpop.f32.mrf.mxu0
    %v348 = vadd.f32 0.0, %v347
    %v349 = vpop.f32.mrf.mxu0
    %v350 = vpop.f32.mrf.mxu0
    %v351 = vadd.f32 0.0, %v350
    %v352 = vpop.f32.mrf.mxu0
    %353 = vdwg.mxu0
    %v354 = vadd.f32 %v246, %v348
    %v355 = vadd.f32 %v247, %v351
    %356 = vst [vmem:[#allocation3] sm:$0xff] %v354
    %357 = vst [vmem:[#allocation3 + $0x8] sm:$0xff] %v355
    // Predicated region
    $region38: #{tpu_custom_call.1} parent=1 // pred_check
      %p358 = pneg %p63
    $region39: #{tpu_custom_call.1} parent=1 // pred_check_branch
      %360 = sbr.rel (%p358) target = $region41
    $region40: #{tpu_custom_call.1} parent=1 // pred_region
      %v361 = vld [vmem:[#allocation3] sm:$0xff]
      %v362 = vld [vmem:[#allocation3 + $0x8] sm:$0xff]
      %v363 = vld [vmem:[%s4] sm:$0x1]
      %v365 = vlaneseq
      %v366 = vshrl.u32 %v365, 7
      %v367 = vsub.s32 0, %v366
      %v368 = vrot.slane %v363, %v367
      %v370 = vadd.f32 %v361, %v368
      %v371 = vadd.f32 %v362, %v368
      %v372 = vld [vmem:[#allocation4] sm:$0xff]
      %v373 = vld [vmem:[#allocation4 + $0x8] sm:$0xff]
      %v374 = vadd.f32 %v370, %v372
      %v375 = vadd.f32 %v371, %v373
      %376 = vst [vmem:[#allocation10] sm:$0xff] %v374
      %377 = vst [vmem:[#allocation10 + $0x8] sm:$0xff] %v375
    $region41: #{tpu_custom_call.1} parent=1 // pred_fallthru
      _
    // Predicated region
    $region42: #{tpu_custom_call.1} parent=1 // pred_check
      _
    $region43: #{tpu_custom_call.1} parent=1 // pred_check_branch
      %379 = sbr.rel (0) target = $region45
    $region44: #{tpu_custom_call.1} parent=1 // pred_region
      %s381 = ssub.s32 256, 256
      %382 = vsyncadd [#allocation6], %s381
      %s383 = sshll.u32 [#allocation10], 4
      %s384 = int_to_ptr.vmem [resolvable:$true] %s383
      %389 = dma.vmem_to_hbm [thread:$0]  %s384, 256, %s5, [#allocation6], 128, 128, 8
    $region45: #{tpu_custom_call.1} parent=1 // pred_fallthru
      _
    // Predicated region
    $region46: #{tpu_custom_call.1} parent=1 // pred_check
      _
    $region47: #{tpu_custom_call.1} parent=1 // pred_check_branch
      %391 = sbr.rel (0) target = $region49
    $region48: #{tpu_custom_call.1} parent=1 // pred_region
      %392 = dma.done [#allocation6], 256
    $region49: #{tpu_custom_call.1} parent=1 // pred_fallthru
      _
    %393 = vsyncpa [#allocation5], 1
    %394 = vsyncpa [#allocation8], 1
    %395 = vsyncpa [#allocation6], 1

</llo_original>
